<compile_context>
chip_gen: v7x
topology: tpu7x:2x2x1
jax: 0.10.0
libtpu: 0.0.40
codegen_flags: <defaults>
</compile_context>

<pallas_src>
import functools

import jax
import jax.numpy as jnp
from jax.experimental import pallas as pl
from jax.experimental.pallas import tpu as pltpu

LEAKY_SLOPE = 0.01   # nn.LeakyReLU() default negative_slope
BN_EPS = 1e-5        # nn.BatchNorm1d default eps


def dense_block_kernel(x_ref, w_ref, p_ref, o_ref, *, n_rows):
    # ---- Linear: y = x @ W_t + b. W_t is pre-transposed to (in_fts, tn), so
    #      this is the MXU-native (N,K)x(K,tn) contraction, f32 accumulation.
    y = jax.lax.dot_general(
        x_ref[...], w_ref[...],
        dimension_numbers=(((1,), (0,)), ((), ())),
        preferred_element_type=jnp.float32,
    )                                            # (N, tn) f32

    p = p_ref[...]                               # (8, tn) packed params, f32
    bias  = p[0:1, :]
    gamma = p[1:2, :]
    beta  = p[2:3, :]

    y = y + bias

    # ---- LeakyReLU (slope < 1  =>  max(y, slope*y)) ----
    y = jnp.maximum(y, LEAKY_SLOPE * y)

    # ---- BatchNorm1d (training-mode biased batch stats), two-pass variance ----
    inv_n = 1.0 / n_rows
    mean = jnp.sum(y, axis=0, keepdims=True) * inv_n            # (1, tn)
    centered = y - mean
    var = jnp.sum(centered * centered, axis=0, keepdims=True) * inv_n
    scale = gamma * jax.lax.rsqrt(var + BN_EPS)                 # (1, tn)

    o_ref[...] = (centered * scale + beta).astype(o_ref.dtype)


def _vmem_capacity_bytes():
    """Physical VMEM of the local chip; conservative (v7x-sized) fallback."""
    try:
        info = pltpu.get_tpu_info()
        for attr in ("vmem_capacity_bytes", "vmem_bytes"):
            val = getattr(info, attr, None)
            if val:
                return int(val)
    except Exception:
        pass
    return 64 * 1024 * 1024


def dense_block(x, weight, bias, gamma, beta, *,
                feature_tile=256, matmul_dtype=None):
    """Fused Linear + LeakyReLU + BatchNorm1d (training-mode batch stats).

    x:      (N, in_fts)         f32
    weight: (out_fts, in_fts)   PyTorch nn.Linear layout
    bias, gamma, beta: (out_fts,)
    matmul_dtype: e.g. jnp.bfloat16 to run the MXU in bf16 (worthwhile on
        v5e/v6e/v7x alike); accumulation and all BN/elementwise math stay f32.
    """
    n, in_fts = x.shape
    out_fts = weight.shape[0]
    out_dtype = x.dtype

    if feature_tile <= 0 or feature_tile % 128 != 0:
        raise ValueError("feature_tile must be a positive multiple of 128 "
                         "(lane-dense output tiles)")

    # --- pick the actual tile: never wider than the (128-rounded) output, and
    #     keep >=2 grid steps when the layer is wide enough (v7x megacore) ---
    rounded_out = pl.cdiv(out_fts, 128) * 128
    tile = min(feature_tile, rounded_out)
    while tile > 128 and pl.cdiv(rounded_out, tile) < 2:
        tile -= 128
    feature_tile = tile

    padded_out = pl.cdiv(out_fts, feature_tile) * feature_tile
    pad = padded_out - out_fts

    # --- one-time transpose to (in_fts, padded_out): MXU-native, lane-dense ---
    w_t = weight.T
    if pad:
        w_t = jnp.pad(w_t, ((0, 0), (0, pad)))
        bias = jnp.pad(bias, (0, pad))
        gamma = jnp.pad(gamma, (0, pad))   # padded features produce 0, sliced off
        beta = jnp.pad(beta, (0, pad))

    # --- pack per-feature params into one sublane-aligned (8, padded_out) ---
    params = (jnp.zeros((8, padded_out), jnp.float32)
              .at[0].set(bias.astype(jnp.float32))
              .at[1].set(gamma.astype(jnp.float32))
              .at[2].set(beta.astype(jnp.float32)))

    # --- optional bf16 MXU path (halves x/W HBM+VMEM traffic) ---
    if matmul_dtype is not None:
        x = x.astype(matmul_dtype)
        w_t = w_t.astype(matmul_dtype)

    grid = (padded_out // feature_tile,)

    # --- VMEM budget: single-buffered x, 2x-buffered weight/params/output,
    #     plus the f32 y/centered temporaries; capped at 75% of physical VMEM
    #     for this chip generation (~96 MiB v5e/v6e, ~48 MiB v7x). ---
    x_itm = jnp.dtype(x.dtype).itemsize
    w_itm = jnp.dtype(w_t.dtype).itemsize
    o_itm = jnp.dtype(out_dtype).itemsize
    budget = int(1.25 * (
        n * in_fts * x_itm                        # x block (1 buffer)
        + 2 * feature_tile * in_fts * w_itm       # weight tile (2 buffers)
        + 2 * 8 * feature_tile * 4                # packed params (2 buffers)
        + 2 * n * feature_tile * o_itm            # output tile (2 buffers)
        + 2 * n * feature_tile * 4))              # y + centered f32 temporaries
    vmem_cap = int(0.75 * _vmem_capacity_bytes())
    vmem_limit = int(min(vmem_cap, max(4 * 1024 * 1024, budget)))

    kernel = functools.partial(dense_block_kernel, n_rows=n)

    def _in_specs(single_buffer_x):
        if single_buffer_x:
            x_spec = pl.BlockSpec((n, in_fts), lambda j: (0, 0),
                                  pipeline_mode=pl.Buffered(1))
        else:
            x_spec = pl.BlockSpec((n, in_fts), lambda j: (0, 0))
        return [
            x_spec,                                               # full batch, resident
            pl.BlockSpec((in_fts, feature_tile), lambda j: (0, j)),  # lane-dense W tile
            pl.BlockSpec((8, feature_tile), lambda j: (0, j)),       # packed params
        ]

    def _run(single_buffer_x):
        return pl.pallas_call(
            kernel,
            out_shape=jax.ShapeDtypeStruct((n, padded_out), out_dtype),
            grid_spec=pltpu.PrefetchScalarGridSpec(
                num_scalar_prefetch=0,
                grid=grid,
                in_specs=_in_specs(single_buffer_x),
                out_specs=pl.BlockSpec((n, feature_tile), lambda j: (0, j)),
            ),
            compiler_params=pltpu.CompilerParams(
                dimension_semantics=("parallel",),   # feature tiles independent
                vmem_limit_bytes=vmem_limit,
            ),
        )(x, w_t, params)

    try:
        out = _run(True)
    except Exception:
        # pipeline_mode / Buffered(1) unsupported on this JAX build: fall back
        # to default double-buffering (correctness identical, only VMEM cost).
        out = _run(False)

    return out[:, :out_fts] if pad else out


def reference(x, weight, bias, gamma, beta):
    y = x @ weight.T + bias
    y = jnp.where(y >= 0, y, LEAKY_SLOPE * y)
    mean = jnp.mean(y, axis=0, keepdims=True)
    var = jnp.mean((y - mean) ** 2, axis=0, keepdims=True)
    return gamma * (y - mean) / jnp.sqrt(var + BN_EPS) + beta


if __name__ == "__main__":
    key = jax.random.PRNGKey(0)
    k_x, k_w, k_b = jax.random.split(key, 3)

    N, IN_FTS, OUT_FTS = 8, 32, 64

    x = jax.random.normal(k_x, (N, IN_FTS), dtype=jnp.float32)

    # Deterministic synthetic parameters (shapes match nn.Linear / BatchNorm1d).
    bound = 1.0 / (IN_FTS ** 0.5)
    weight = jax.random.uniform(k_w, (OUT_FTS, IN_FTS), jnp.float32, -bound, bound)
    bias = jax.random.uniform(k_b, (OUT_FTS,), jnp.float32, -bound, bound)
    gamma = jnp.ones((OUT_FTS,), jnp.float32)   # BN weight init
    beta = jnp.zeros((OUT_FTS,), jnp.float32)   # BN bias init

    ref = reference(x, weight, bias, gamma, beta)

    # f32 MXU path — tight tolerance check.
    out = dense_block(x, weight, bias, gamma, beta)
    jax.block_until_ready(out)
    assert out.shape == (N, OUT_FTS)
    assert jnp.allclose(out, ref, atol=1e-4, rtol=1e-4)

    # bf16 MXU path (fast path on all generations) — loose tolerance check.
    # Note: BN mean/var are computed on the bf16-rounded pre-activations.
    out_bf16 = dense_block(x, weight, bias, gamma, beta,
                           matmul_dtype=jnp.bfloat16)
    jax.block_until_ready(out_bf16)
    assert out_bf16.shape == (N, OUT_FTS)
    assert jnp.allclose(out_bf16, ref, atol=2e-1, rtol=2e-1)

    # TODO(synk): BatchNorm1d running_mean/running_var side-effect updates are
    # not modeled; this kernel reproduces the training-mode forward output only.

    print("KERNEL_OK")
</pallas_src>

<mosaic_0001>
module attributes {stable_mosaic.version = 11 : i64} {
  func.func @dense_block_kernel(%arg0: i32, %arg1: memref<8x32xf32, #tpu.memory_space<vmem>>, %arg2: memref<32x128xf32, #tpu.memory_space<vmem>>, %arg3: memref<8x128xf32, #tpu.memory_space<vmem>>, %arg4: memref<8x128xf32, #tpu.memory_space<vmem>>) attributes {dimension_semantics = [#tpu.dimension_semantics<parallel>], iteration_bounds = array<i64: 1>, scalar_prefetch = 0 : i64, scratch_operands = 0 : i64, tpu.core_type = #tpu.core_type<tc>, window_params = [{pipeline_mode = #tpu.pipeline_mode<synchronous>, transform_indices = @transform_0, window_bounds = array<i64: 8, 32>}, {transform_indices = @transform_1, window_bounds = array<i64: 32, 128>}, {transform_indices = @transform_2, window_bounds = array<i64: 8, 128>}, {transform_indices = @transform_3, window_bounds = array<i64: 8, 128>}]} {
    %c0 = arith.constant 0 : index
    %c0_0 = arith.constant 0 : index
    %0 = vector.load %arg1[%c0, %c0_0] : memref<8x32xf32, #tpu.memory_space<vmem>>, vector<8x32xf32>
    %c0_1 = arith.constant 0 : index
    %c0_2 = arith.constant 0 : index
    %1 = vector.load %arg2[%c0_1, %c0_2] : memref<32x128xf32, #tpu.memory_space<vmem>>, vector<32x128xf32>
    %cst = arith.constant dense<0.000000e+00> : vector<8x128xf32>
    %2 = tpu.matmul %0, %1, %cst {dimension_numbers = #tpu.dot_dimension_numbers<[1], [0], [0], [1], [0, 0, 1, 1], [], []>} : vector<8x32xf32>, vector<32x128xf32>, vector<8x128xf32> -> vector<8x128xf32>
    %c0_3 = arith.constant 0 : index
    %c0_4 = arith.constant 0 : index
    %3 = vector.load %arg3[%c0_3, %c0_4] : memref<8x128xf32, #tpu.memory_space<vmem>>, vector<8x128xf32>
    %4 = vector.extract_strided_slice %3 {offsets = [0, 0], sizes = [1, 128], strides = [1, 1]} : vector<8x128xf32> to vector<1x128xf32>
    %5 = vector.extract_strided_slice %3 {offsets = [1, 0], sizes = [1, 128], strides = [1, 1]} : vector<8x128xf32> to vector<1x128xf32>
    %6 = vector.extract_strided_slice %3 {offsets = [2, 0], sizes = [1, 128], strides = [1, 1]} : vector<8x128xf32> to vector<1x128xf32>
    %7 = vector.broadcast %4 : vector<1x128xf32> to vector<8x128xf32>
    %8 = arith.addf %2, %7 : vector<8x128xf32>
    %cst_5 = arith.constant 0.00999999977 : f32
    %9 = vector.broadcast %cst_5 : f32 to vector<8x128xf32>
    %10 = arith.mulf %9, %8 : vector<8x128xf32>
    %11 = arith.maximumf %8, %10 : vector<8x128xf32>
    %cst_6 = arith.constant dense<0.000000e+00> : vector<128xf32>
    %12 = vector.multi_reduction <add>, %11, %cst_6 [0] : vector<8x128xf32> to vector<128xf32>
    %13 = vector.shape_cast %12 : vector<128xf32> to vector<1x128xf32>
    %cst_7 = arith.constant 1.250000e-01 : f32
    %14 = vector.broadcast %cst_7 : f32 to vector<1x128xf32>
    %15 = arith.mulf %13, %14 : vector<1x128xf32>
    %16 = vector.broadcast %15 : vector<1x128xf32> to vector<8x128xf32>
    %17 = arith.subf %11, %16 : vector<8x128xf32>
    %18 = arith.mulf %17, %17 : vector<8x128xf32>
    %cst_8 = arith.constant dense<0.000000e+00> : vector<128xf32>
    %19 = vector.multi_reduction <add>, %18, %cst_8 [0] : vector<8x128xf32> to vector<128xf32>
    %20 = vector.shape_cast %19 : vector<128xf32> to vector<1x128xf32>
    %cst_9 = arith.constant 1.250000e-01 : f32
    %21 = vector.broadcast %cst_9 : f32 to vector<1x128xf32>
    %22 = arith.mulf %20, %21 : vector<1x128xf32>
    %cst_10 = arith.constant 9.99999974E-6 : f32
    %23 = vector.broadcast %cst_10 : f32 to vector<1x128xf32>
    %24 = arith.addf %22, %23 : vector<1x128xf32>
    %25 = math.rsqrt %24 : vector<1x128xf32>
    %26 = arith.mulf %5, %25 : vector<1x128xf32>
    %27 = vector.broadcast %26 : vector<1x128xf32> to vector<8x128xf32>
    %28 = arith.mulf %17, %27 : vector<8x128xf32>
    %29 = vector.broadcast %6 : vector<1x128xf32> to vector<8x128xf32>
    %30 = arith.addf %28, %29 : vector<8x128xf32>
    %c0_11 = arith.constant 0 : index
    %c0_12 = arith.constant 0 : index
    %31 = vector.load %arg4[%c0_11, %c0_12] : memref<8x128xf32, #tpu.memory_space<vmem>>, vector<8x128xf32>
    tpu.vector_store %arg4[%c0_11, %c0_12], %30 {strides = array<i32>} : memref<8x128xf32, #tpu.memory_space<vmem>>, vector<8x128xf32>,
    return
  }
  func.func @transform_0(%arg0: i32) -> (i32, i32) {
    %c0_i32 = arith.constant 0 : i32
    %c0_i32_0 = arith.constant 0 : i32
    %c0_i32_1 = arith.constant 0 : i32
    return %c0_i32, %c0_i32_0 : i32, i32
  }
  func.func @transform_1(%arg0: i32) -> (i32, i32) {
    %c0_i32 = arith.constant 0 : i32
    %c0_i32_0 = arith.constant 0 : i32
    return %c0_i32, %arg0 : i32, i32
  }
  func.func @transform_2(%arg0: i32) -> (i32, i32) {
    %c0_i32 = arith.constant 0 : i32
    %c0_i32_0 = arith.constant 0 : i32
    return %c0_i32, %arg0 : i32, i32
  }
  func.func @transform_3(%arg0: i32) -> (i32, i32) {
    %c0_i32 = arith.constant 0 : i32
    %c0_i32_0 = arith.constant 0 : i32
    return %c0_i32, %arg0 : i32, i32
  }
}

module attributes {stable_mosaic.version = 11 : i64} {
  func.func @dense_block_kernel(%arg0: i32, %arg1: memref<8x32xf32, #tpu.memory_space<vmem>>, %arg2: memref<32x128xf32, #tpu.memory_space<vmem>>, %arg3: memref<8x128xf32, #tpu.memory_space<vmem>>, %arg4: memref<8x128xf32, #tpu.memory_space<vmem>>) attributes {dimension_semantics = [#tpu.dimension_semantics<parallel>], iteration_bounds = array<i64: 1>, scalar_prefetch = 0 : i64, scratch_operands = 0 : i64, tpu.core_type = #tpu.core_type<tc>, window_params = [{pipeline_mode = #tpu.pipeline_mode<synchronous>, transform_indices = @transform_0, window_bounds = array<i64: 8, 32>}, {transform_indices = @transform_1, window_bounds = array<i64: 32, 128>}, {transform_indices = @transform_2, window_bounds = array<i64: 8, 128>}, {transform_indices = @transform_3, window_bounds = array<i64: 8, 128>}]} {
    %c0 = arith.constant 0 : index
    %c0_0 = arith.constant 0 : index
    %0 = vector.load %arg1[%c0, %c0_0] : memref<8x32xf32, #tpu.memory_space<vmem>>, vector<8x32xf32>
    %c0_1 = arith.constant 0 : index
    %c0_2 = arith.constant 0 : index
    %1 = vector.load %arg2[%c0_1, %c0_2] : memref<32x128xf32, #tpu.memory_space<vmem>>, vector<32x128xf32>
    %cst = arith.constant dense<0.000000e+00> : vector<8x128xf32>
    %2 = tpu.matmul %0, %1, %cst {dimension_numbers = #tpu.dot_dimension_numbers<[1], [0], [0], [1], [0, 0, 1, 1], [], []>} : vector<8x32xf32>, vector<32x128xf32>, vector<8x128xf32> -> vector<8x128xf32>
    %c0_3 = arith.constant 0 : index
    %c0_4 = arith.constant 0 : index
    %3 = vector.load %arg3[%c0_3, %c0_4] : memref<8x128xf32, #tpu.memory_space<vmem>>, vector<8x128xf32>
    %4 = vector.extract_strided_slice %3 {offsets = [0, 0], sizes = [1, 128], strides = [1, 1]} : vector<8x128xf32> to vector<1x128xf32>
    %5 = vector.extract_strided_slice %3 {offsets = [1, 0], sizes = [1, 128], strides = [1, 1]} : vector<8x128xf32> to vector<1x128xf32>
    %6 = vector.extract_strided_slice %3 {offsets = [2, 0], sizes = [1, 128], strides = [1, 1]} : vector<8x128xf32> to vector<1x128xf32>
    %7 = vector.broadcast %4 : vector<1x128xf32> to vector<8x128xf32>
    %8 = arith.addf %2, %7 : vector<8x128xf32>
    %cst_5 = arith.constant 0.00999999977 : f32
    %9 = vector.broadcast %cst_5 : f32 to vector<8x128xf32>
    %10 = arith.mulf %9, %8 : vector<8x128xf32>
    %11 = arith.maximumf %8, %10 : vector<8x128xf32>
    %cst_6 = arith.constant dense<0.000000e+00> : vector<128xf32>
    %12 = vector.multi_reduction <add>, %11, %cst_6 [0] : vector<8x128xf32> to vector<128xf32>
    %13 = vector.shape_cast %12 : vector<128xf32> to vector<1x128xf32>
    %cst_7 = arith.constant 1.250000e-01 : f32
    %14 = vector.broadcast %cst_7 : f32 to vector<1x128xf32>
    %15 = arith.mulf %13, %14 : vector<1x128xf32>
    %16 = vector.broadcast %15 : vector<1x128xf32> to vector<8x128xf32>
    %17 = arith.subf %11, %16 : vector<8x128xf32>
    %18 = arith.mulf %17, %17 : vector<8x128xf32>
    %cst_8 = arith.constant dense<0.000000e+00> : vector<128xf32>
    %19 = vector.multi_reduction <add>, %18, %cst_8 [0] : vector<8x128xf32> to vector<128xf32>
    %20 = vector.shape_cast %19 : vector<128xf32> to vector<1x128xf32>
    %cst_9 = arith.constant 1.250000e-01 : f32
    %21 = vector.broadcast %cst_9 : f32 to vector<1x128xf32>
    %22 = arith.mulf %20, %21 : vector<1x128xf32>
    %cst_10 = arith.constant 9.99999974E-6 : f32
    %23 = vector.broadcast %cst_10 : f32 to vector<1x128xf32>
    %24 = arith.addf %22, %23 : vector<1x128xf32>
    %25 = math.rsqrt %24 : vector<1x128xf32>
    %26 = arith.mulf %5, %25 : vector<1x128xf32>
    %27 = vector.broadcast %26 : vector<1x128xf32> to vector<8x128xf32>
    %28 = arith.mulf %17, %27 : vector<8x128xf32>
    %29 = vector.broadcast %6 : vector<1x128xf32> to vector<8x128xf32>
    %30 = arith.addf %28, %29 : vector<8x128xf32>
    %c0_11 = arith.constant 0 : index
    %c0_12 = arith.constant 0 : index
    %31 = vector.load %arg4[%c0_11, %c0_12] : memref<8x128xf32, #tpu.memory_space<vmem>>, vector<8x128xf32>
    tpu.vector_store %arg4[%c0_11, %c0_12], %30 {strides = array<i32>} : memref<8x128xf32, #tpu.memory_space<vmem>>, vector<8x128xf32>,
    return
  }
  func.func @transform_0(%arg0: i32) -> (i32, i32) {
    %c0_i32 = arith.constant 0 : i32
    %c0_i32_0 = arith.constant 0 : i32
    %c0_i32_1 = arith.constant 0 : i32
    return %c0_i32, %c0_i32_0 : i32, i32
  }
  func.func @transform_1(%arg0: i32) -> (i32, i32) {
    %c0_i32 = arith.constant 0 : i32
    %c0_i32_0 = arith.constant 0 : i32
    return %c0_i32, %arg0 : i32, i32
  }
  func.func @transform_2(%arg0: i32) -> (i32, i32) {
    %c0_i32 = arith.constant 0 : i32
    %c0_i32_0 = arith.constant 0 : i32
    return %c0_i32, %arg0 : i32, i32
  }
  func.func @transform_3(%arg0: i32) -> (i32, i32) {
    %c0_i32 = arith.constant 0 : i32
    %c0_i32_0 = arith.constant 0 : i32
    return %c0_i32, %arg0 : i32, i32
  }
}

</mosaic_0001>

<llo_original>
// kernel: tpu_custom_call.1
$region0: #{tpu_custom_call.1}
  #allocation0 [shape = 'u32[]', space=smem, size = 0x4, offset = 0x4, fixed_abs, tag = 'smem constant byte address 0x4 - core index']
  #allocation1 [shape = 'u32[144,128]{1,0:T(1,128)}', space=vmem, size = 0x12000, scoped, tag = 'internal scratch']
  %s0 = inlined_call_operand.hbm [shape: f32[8,32], index: 0, kind: input, shape index: {}]
  %s1 = inlined_call_operand.hbm [shape: f32[32,128], index: 1, kind: input, shape index: {}]
  %s2 = inlined_call_operand.hbm [shape: f32[8,128], index: 2, kind: input, shape index: {}]
  %s3 = inlined_call_operand.hbm [shape: f32[8,128], index: 3, kind: output, shape index: {}]
  %s4 = sld [smem:[#allocation0]]
  $region34: #{tpu_custom_call.1} parent=0
    _
  %s6 = ssub.s32 1, %s4
  %s7 = scalar_select 0, %s6, %s4
  $region1: #{tpu_custom_call.1} parent=0
    #allocation2 [shape = 'u8[4096]{0}', space=vmem, size = 0x1000, scoped, tag = 'input window, operand 0, single buffered']
    #allocation3 [shape = 's32[1]{0}', space=sflag, size = 0x4, scoped, tag = 'scoped memory for tpu_custom_call.1']
    #allocation4 [shape = 's32[1]{0}', space=sflag, size = 0x4, scoped, tag = 'scoped memory for tpu_custom_call.1']
    #allocation5 [shape = 'u8[16384]{0}', space=vmem, size = 0x4000, scoped, tag = 'input window, operand 1, single buffered']
    #allocation6 [shape = 's32[1]{0}', space=sflag, size = 0x4, scoped, tag = 'scoped memory for tpu_custom_call.1']
    #allocation7 [shape = 'u8[4096]{0}', space=vmem, size = 0x1000, scoped, tag = 'input window, operand 2, single buffered']
    #allocation8 [shape = 'u8[4096]{0}', space=vmem, size = 0x1000, scoped, tag = 'output window, operand 0, single buffered']
    %8 = vsyncpa [#allocation3], 0
    %9 = vsyncpa [#allocation6], 0
    %10 = vsyncpa [#allocation4], 0
    // Predicated region
    $region2: #{tpu_custom_call.1} parent=1 // pred_check
      _
    $region3: #{tpu_custom_call.1} parent=1 // pred_check_branch
      %12 = sbr.rel (0) target = $region5
    $region4: #{tpu_custom_call.1} parent=1 // pred_region
      %s14 = ssub.s32 128, 128
      %15 = vsyncadd [#allocation3], %s14
      %s17 = sshll.u32 [#allocation2], 4
      %s18 = int_to_ptr.vmem [resolvable:$true] %s17
      %20 = dma.hbm_to_vmem [thread:$0]  %s0, 128, %s18, [#allocation3]
    $region5: #{tpu_custom_call.1} parent=1 // pred_fallthru
      _
    // Predicated region
    $region6: #{tpu_custom_call.1} parent=1 // pred_check
      _
    $region7: #{tpu_custom_call.1} parent=1 // pred_check_branch
      %22 = sbr.rel (0) target = $region9
    $region8: #{tpu_custom_call.1} parent=1 // pred_region
      %s24 = ssub.s32 512, 512
      %25 = vsyncadd [#allocation6], %s24
      %s26 = sshll.u32 [#allocation5], 4
      %s27 = int_to_ptr.vmem [resolvable:$true] %s26
      %32 = dma.hbm_to_vmem [thread:$0]  %s1, 512, %s27, [#allocation6], 128, 128, 8
    $region9: #{tpu_custom_call.1} parent=1 // pred_fallthru
      _
    // Predicated region
    $region10: #{tpu_custom_call.1} parent=1 // pred_check
      _
    $region11: #{tpu_custom_call.1} parent=1 // pred_check_branch
      %34 = sbr.rel (0) target = $region13
    $region12: #{tpu_custom_call.1} parent=1 // pred_region
      %s36 = ssub.s32 128, 128
      %37 = vsyncadd [#allocation6], %s36
      %s39 = sshll.u32 [#allocation7], 4
      %s40 = int_to_ptr.vmem [resolvable:$true] %s39
      %42 = dma.hbm_to_vmem [thread:$0]  %s2, 128, %s40, [#allocation6]
    $region13: #{tpu_custom_call.1} parent=1 // pred_fallthru
      _
    // Predicated region
    $region14: #{tpu_custom_call.1} parent=1 // pred_check
      _
    $region15: #{tpu_custom_call.1} parent=1 // pred_check_branch
      %44 = sbr.rel (0) target = $region17
    $region16: #{tpu_custom_call.1} parent=1 // pred_region
      %45 = dma.done [#allocation3], 128
    $region17: #{tpu_custom_call.1} parent=1 // pred_fallthru
      _
    // Predicated region
    $region18: #{tpu_custom_call.1} parent=1 // pred_check
      _
    $region19: #{tpu_custom_call.1} parent=1 // pred_check_branch
      %47 = sbr.rel (0) target = $region21
    $region20: #{tpu_custom_call.1} parent=1 // pred_region
      %48 = dma.done [#allocation6], 512
    $region21: #{tpu_custom_call.1} parent=1 // pred_fallthru
      _
    // Predicated region
    $region22: #{tpu_custom_call.1} parent=1 // pred_check
      _
    $region23: #{tpu_custom_call.1} parent=1 // pred_check_branch
      %50 = sbr.rel (0) target = $region25
    $region24: #{tpu_custom_call.1} parent=1 // pred_region
      %51 = dma.done [#allocation6], 128
    $region25: #{tpu_custom_call.1} parent=1 // pred_fallthru
      _
    %v52 = vld [vmem:[#allocation2] sm:$0xff]
    %v53 = vld [vmem:[#allocation5] sm:$0xff]
    %v54 = vld [vmem:[#allocation5 + $0x8] sm:$0xff]
    %v55 = vld [vmem:[#allocation5 + $0x10] sm:$0xff]
    %v56 = vld [vmem:[#allocation5 + $0x18] sm:$0xff]
    %v57 = vld [vmem:[#allocation7] sm:$0xff]
    %v58 = vlaneseq
    %v59 = vshrl.u32 %v58, 7
    %v60 = vsub.s32 0, %v59
    %v61 = vrot.slane %v57, %v60
    %vm62 = vcmask 261120
    %v64 = vsel %vm62, %v52, 0
    %66 = vmatprep.subr.mxu0 0.0
    %67 = vmatpush1.msra.mxu0 %v53
    %68 = vmatprep.subr.mxu0 0.0
    %69 = vmatpush1.msra.mxu0 %v54
    %70 = vmatprep.subr.mxu0 0.0
    %71 = vmatpush1.msra.mxu0 %v55
    %72 = vmatprep.subr.mxu0 0.0
    %73 = vmatpush1.msra.mxu0 %v56
    %74 = vmatprep.subr.mxu0 0.0
    %75 = vmatpush1.msra.mxu0 0.0
    %76 = vmatprep.subr.mxu0 0.0
    %77 = vmatpush1.msra.mxu0 0.0
    %78 = vmatprep.subr.mxu0 0.0
    %79 = vmatpush1.msra.mxu0 0.0
    %80 = vmatprep.subr.mxu0 0.0
    %81 = vmatpush1.msra.mxu0 0.0
    %82 = vmatprep.subr.mxu0 0.0
    %83 = vmatpush1.msra.mxu0 0.0
    %84 = vmatprep.subr.mxu0 0.0
    %85 = vmatpush1.msra.mxu0 0.0
    %86 = vmatprep.subr.mxu0 0.0
    %87 = vmatpush1.msra.mxu0 0.0
    %88 = vmatprep.subr.mxu0 0.0
    %89 = vmatpush1.msra.mxu0 0.0
    %90 = vmatprep.subr.mxu0 0.0
    %91 = vmatpush1.msra.mxu0 0.0
    %92 = vmatprep.subr.mxu0 0.0
    %93 = vmatpush1.msra.mxu0 0.0
    %94 = vmatprep.subr.mxu0 0.0
    %95 = vmatpush1.msra.mxu0 0.0
    %96 = vmatprep.subr.mxu0 0.0
    %97 = vmatpush1.msra.mxu0 0.0
    %98 = vmatprep.subr.mxu0 0.0
    %99 = vmatpush1.msra.mxu0 0.0
    %100 = vmatprep.subr.mxu0 0.0
    %101 = vmatpush1.msra.mxu0 0.0
    %102 = vmatprep.subr.mxu0 0.0
    %103 = vmatpush1.msra.mxu0 0.0
    %104 = vmatprep.subr.mxu0 0.0
    %105 = vmatpush1.msra.mxu0 0.0
    %106 = vmatprep.subr.mxu0 0.0
    %107 = vmatpush1.msra.mxu0 0.0
    %108 = vmatprep.subr.mxu0 0.0
    %109 = vmatpush1.msra.mxu0 0.0
    %110 = vmatprep.subr.mxu0 0.0
    %111 = vmatpush1.msra.mxu0 0.0
    %112 = vmatprep.subr.mxu0 0.0
    %113 = vmatpush1.msra.mxu0 0.0
    %114 = vmatprep.subr.mxu0 0.0
    %115 = vmatpush1.msra.mxu0 0.0
    %116 = vmatprep.subr.mxu0 0.0
    %117 = vmatpush1.msra.mxu0 0.0
    %118 = vmatprep.subr.mxu0 0.0
    %119 = vmatpush1.msra.mxu0 0.0
    %120 = vmatprep.subr.mxu0 0.0
    %121 = vmatpush1.msra.mxu0 0.0
    %122 = vmatprep.subr.mxu0 0.0
    %123 = vmatpush1.msra.mxu0 0.0
    %124 = vmatprep.subr.mxu0 0.0
    %125 = vmatpush1.msra.mxu0 0.0
    %126 = vmatprep.subr.mxu0 0.0
    %127 = vmatpush1.msra.mxu0 0.0
    %128 = vmatprep.subr.mxu0 0.0
    %129 = vmatpush1.msra.mxu0 0.0
    %130 = vmatprep.mubr.f32.mxu0 0.0
    %131 = vmatmul.mubr.f32.gmra.mrb[0].mxu0 %v64
    %v132 = vpop.f32.mrb[0].mxu0
    %v133 = vadd.f32 %v61, %v132
    %v134 = vpop.f32.mrb[0].mxu0
    %135 = vdwg.mxu0
    %v136 = vmul.f32 %v133, 0.01
    %v137 = vmax.f32 %v133, %v136
    %v138 = vrot.slane %v137, 4
    %v139 = vadd.f32 %v137, %v138
    %v140 = vrot.slane %v139, 2
    %v141 = vadd.f32 %v139, %v140
    %v142 = vrot.slane %v141, 1
    %v143 = vadd.f32 %v141, %v142
    %v144 = vmul.f32 %v143, 0.125
    %v145 = vsub.f32 %v137, %v144
    %v146 = vmul.f32 %v145, %v145
    %v147 = vrot.slane %v146, 4
    %v148 = vadd.f32 %v146, %v147
    %v149 = vrot.slane %v148, 2
    %v150 = vadd.f32 %v148, %v149
    %v151 = vrot.slane %v150, 1
    %v152 = vadd.f32 %v150, %v151
    %v153 = vmul.f32 %v152, 0.125
    %v154 = vadd.f32 %v153, 1e-05
    %v155 = vrsqrt.pop %v154
    %v156 = vmul.f32 %v57, %v155
    %v157 = vlaneseq
    %v158 = vshrl.u32 %v157, 7
    %v159 = vsub.s32 1, %v158
    %v160 = vrot.slane %v156, %v159
    %v161 = vmul.f32 %v145, %v160
    %v162 = vlaneseq
    %v163 = vshrl.u32 %v162, 7
    %v164 = vsub.s32 2, %v163
    %v165 = vrot.slane %v57, %v164
    %v166 = vadd.f32 %v161, %v165
    %167 = vst [vmem:[#allocation8] sm:$0xff] %v166
    // Predicated region
    $region26: #{tpu_custom_call.1} parent=1 // pred_check
      _
    $region27: #{tpu_custom_call.1} parent=1 // pred_check_branch
      %169 = sbr.rel (0) target = $region29
    $region28: #{tpu_custom_call.1} parent=1 // pred_region
      %s171 = ssub.s32 128, 128
      %172 = vsyncadd [#allocation4], %s171
      %s174 = sshll.u32 [#allocation8], 4
      %s175 = int_to_ptr.vmem [resolvable:$true] %s174
      %177 = dma.vmem_to_hbm [thread:$0]  %s175, 128, %s3, [#allocation4]
    $region29: #{tpu_custom_call.1} parent=1 // pred_fallthru
      _
    // Predicated region
    $region30: #{tpu_custom_call.1} parent=1 // pred_check
      _
    $region31: #{tpu_custom_call.1} parent=1 // pred_check_branch
      %179 = sbr.rel (0) target = $region33
    $region32: #{tpu_custom_call.1} parent=1 // pred_region
      %180 = dma.done [#allocation4], 128
    $region33: #{tpu_custom_call.1} parent=1 // pred_fallthru
      _
    %181 = vsyncpa [#allocation3], 1
    %182 = vsyncpa [#allocation6], 1
    %183 = vsyncpa [#allocation4], 1

// kernel: tpu_custom_call.1
$region0: #{tpu_custom_call.1}
  #allocation0 [shape = 'u32[]', space=smem, size = 0x4, offset = 0x4, fixed_abs, tag = 'smem constant byte address 0x4 - core index']
  #allocation1 [shape = 'u32[144,128]{1,0:T(1,128)}', space=vmem, size = 0x12000, scoped, tag = 'internal scratch']
  %s0 = inlined_call_operand.hbm [shape: f32[8,32], index: 0, kind: input, shape index: {}]
  %s1 = inlined_call_operand.hbm [shape: f32[32,128], index: 1, kind: input, shape index: {}]
  %s2 = inlined_call_operand.hbm [shape: f32[8,128], index: 2, kind: input, shape index: {}]
  %s3 = inlined_call_operand.hbm [shape: f32[8,128], index: 3, kind: output, shape index: {}]
  %s4 = sld [smem:[#allocation0]]
  $region34: #{tpu_custom_call.1} parent=0
    _
  %s6 = ssub.s32 1, %s4
  %s7 = scalar_select 0, %s6, %s4
  $region1: #{tpu_custom_call.1} parent=0
    #allocation2 [shape = 'u8[4096]{0}', space=vmem, size = 0x1000, scoped, tag = 'input window, operand 0, single buffered']
    #allocation3 [shape = 's32[1]{0}', space=sflag, size = 0x4, scoped, tag = 'scoped memory for tpu_custom_call.1']
    #allocation4 [shape = 's32[1]{0}', space=sflag, size = 0x4, scoped, tag = 'scoped memory for tpu_custom_call.1']
    #allocation5 [shape = 'u8[16384]{0}', space=vmem, size = 0x4000, scoped, tag = 'input window, operand 1, single buffered']
    #allocation6 [shape = 's32[1]{0}', space=sflag, size = 0x4, scoped, tag = 'scoped memory for tpu_custom_call.1']
    #allocation7 [shape = 'u8[4096]{0}', space=vmem, size = 0x1000, scoped, tag = 'input window, operand 2, single buffered']
    #allocation8 [shape = 'u8[4096]{0}', space=vmem, size = 0x1000, scoped, tag = 'output window, operand 0, single buffered']
    %8 = vsyncpa [#allocation3], 0
    %9 = vsyncpa [#allocation6], 0
    %10 = vsyncpa [#allocation4], 0
    // Predicated region
    $region2: #{tpu_custom_call.1} parent=1 // pred_check
      _
    $region3: #{tpu_custom_call.1} parent=1 // pred_check_branch
      %12 = sbr.rel (0) target = $region5
    $region4: #{tpu_custom_call.1} parent=1 // pred_region
      %s14 = ssub.s32 128, 128
      %15 = vsyncadd [#allocation3], %s14
      %s17 = sshll.u32 [#allocation2], 4
      %s18 = int_to_ptr.vmem [resolvable:$true] %s17
      %20 = dma.hbm_to_vmem [thread:$0]  %s0, 128, %s18, [#allocation3]
    $region5: #{tpu_custom_call.1} parent=1 // pred_fallthru
      _
    // Predicated region
    $region6: #{tpu_custom_call.1} parent=1 // pred_check
      _
    $region7: #{tpu_custom_call.1} parent=1 // pred_check_branch
      %22 = sbr.rel (0) target = $region9
    $region8: #{tpu_custom_call.1} parent=1 // pred_region
      %s24 = ssub.s32 512, 512
      %25 = vsyncadd [#allocation6], %s24
      %s26 = sshll.u32 [#allocation5], 4
      %s27 = int_to_ptr.vmem [resolvable:$true] %s26
      %32 = dma.hbm_to_vmem [thread:$0]  %s1, 512, %s27, [#allocation6], 128, 128, 8
    $region9: #{tpu_custom_call.1} parent=1 // pred_fallthru
      _
    // Predicated region
    $region10: #{tpu_custom_call.1} parent=1 // pred_check
      _
    $region11: #{tpu_custom_call.1} parent=1 // pred_check_branch
      %34 = sbr.rel (0) target = $region13
    $region12: #{tpu_custom_call.1} parent=1 // pred_region
      %s36 = ssub.s32 128, 128
      %37 = vsyncadd [#allocation6], %s36
      %s39 = sshll.u32 [#allocation7], 4
      %s40 = int_to_ptr.vmem [resolvable:$true] %s39
      %42 = dma.hbm_to_vmem [thread:$0]  %s2, 128, %s40, [#allocation6]
    $region13: #{tpu_custom_call.1} parent=1 // pred_fallthru
      _
    // Predicated region
    $region14: #{tpu_custom_call.1} parent=1 // pred_check
      _
    $region15: #{tpu_custom_call.1} parent=1 // pred_check_branch
      %44 = sbr.rel (0) target = $region17
    $region16: #{tpu_custom_call.1} parent=1 // pred_region
      %45 = dma.done [#allocation3], 128
    $region17: #{tpu_custom_call.1} parent=1 // pred_fallthru
      _
    // Predicated region
    $region18: #{tpu_custom_call.1} parent=1 // pred_check
      _
    $region19: #{tpu_custom_call.1} parent=1 // pred_check_branch
      %47 = sbr.rel (0) target = $region21
    $region20: #{tpu_custom_call.1} parent=1 // pred_region
      %48 = dma.done [#allocation6], 512
    $region21: #{tpu_custom_call.1} parent=1 // pred_fallthru
      _
    // Predicated region
    $region22: #{tpu_custom_call.1} parent=1 // pred_check
      _
    $region23: #{tpu_custom_call.1} parent=1 // pred_check_branch
      %50 = sbr.rel (0) target = $region25
    $region24: #{tpu_custom_call.1} parent=1 // pred_region
      %51 = dma.done [#allocation6], 128
    $region25: #{tpu_custom_call.1} parent=1 // pred_fallthru
      _
    %v52 = vld [vmem:[#allocation2] sm:$0xff]
    %v53 = vld [vmem:[#allocation5] sm:$0xff]
    %v54 = vld [vmem:[#allocation5 + $0x8] sm:$0xff]
    %v55 = vld [vmem:[#allocation5 + $0x10] sm:$0xff]
    %v56 = vld [vmem:[#allocation5 + $0x18] sm:$0xff]
    %v57 = vld [vmem:[#allocation7] sm:$0xff]
    %v58 = vlaneseq
    %v59 = vshrl.u32 %v58, 7
    %v60 = vsub.s32 0, %v59
    %v61 = vrot.slane %v57, %v60
    %vm62 = vcmask 261120
    %v64 = vsel %vm62, %v52, 0
    %66 = vmatprep.subr.mxu0 0.0
    %67 = vmatpush1.msra.mxu0 %v53
    %68 = vmatprep.subr.mxu0 0.0
    %69 = vmatpush1.msra.mxu0 %v54
    %70 = vmatprep.subr.mxu0 0.0
    %71 = vmatpush1.msra.mxu0 %v55
    %72 = vmatprep.subr.mxu0 0.0
    %73 = vmatpush1.msra.mxu0 %v56
    %74 = vmatprep.subr.mxu0 0.0
    %75 = vmatpush1.msra.mxu0 0.0
    %76 = vmatprep.subr.mxu0 0.0
    %77 = vmatpush1.msra.mxu0 0.0
    %78 = vmatprep.subr.mxu0 0.0
    %79 = vmatpush1.msra.mxu0 0.0
    %80 = vmatprep.subr.mxu0 0.0
    %81 = vmatpush1.msra.mxu0 0.0
    %82 = vmatprep.subr.mxu0 0.0
    %83 = vmatpush1.msra.mxu0 0.0
    %84 = vmatprep.subr.mxu0 0.0
    %85 = vmatpush1.msra.mxu0 0.0
    %86 = vmatprep.subr.mxu0 0.0
    %87 = vmatpush1.msra.mxu0 0.0
    %88 = vmatprep.subr.mxu0 0.0
    %89 = vmatpush1.msra.mxu0 0.0
    %90 = vmatprep.subr.mxu0 0.0
    %91 = vmatpush1.msra.mxu0 0.0
    %92 = vmatprep.subr.mxu0 0.0
    %93 = vmatpush1.msra.mxu0 0.0
    %94 = vmatprep.subr.mxu0 0.0
    %95 = vmatpush1.msra.mxu0 0.0
    %96 = vmatprep.subr.mxu0 0.0
    %97 = vmatpush1.msra.mxu0 0.0
    %98 = vmatprep.subr.mxu0 0.0
    %99 = vmatpush1.msra.mxu0 0.0
    %100 = vmatprep.subr.mxu0 0.0
    %101 = vmatpush1.msra.mxu0 0.0
    %102 = vmatprep.subr.mxu0 0.0
    %103 = vmatpush1.msra.mxu0 0.0
    %104 = vmatprep.subr.mxu0 0.0
    %105 = vmatpush1.msra.mxu0 0.0
    %106 = vmatprep.subr.mxu0 0.0
    %107 = vmatpush1.msra.mxu0 0.0
    %108 = vmatprep.subr.mxu0 0.0
    %109 = vmatpush1.msra.mxu0 0.0
    %110 = vmatprep.subr.mxu0 0.0
    %111 = vmatpush1.msra.mxu0 0.0
    %112 = vmatprep.subr.mxu0 0.0
    %113 = vmatpush1.msra.mxu0 0.0
    %114 = vmatprep.subr.mxu0 0.0
    %115 = vmatpush1.msra.mxu0 0.0
    %116 = vmatprep.subr.mxu0 0.0
    %117 = vmatpush1.msra.mxu0 0.0
    %118 = vmatprep.subr.mxu0 0.0
    %119 = vmatpush1.msra.mxu0 0.0
    %120 = vmatprep.subr.mxu0 0.0
    %121 = vmatpush1.msra.mxu0 0.0
    %122 = vmatprep.subr.mxu0 0.0
    %123 = vmatpush1.msra.mxu0 0.0
    %124 = vmatprep.subr.mxu0 0.0
    %125 = vmatpush1.msra.mxu0 0.0
    %126 = vmatprep.subr.mxu0 0.0
    %127 = vmatpush1.msra.mxu0 0.0
    %128 = vmatprep.subr.mxu0 0.0
    %129 = vmatpush1.msra.mxu0 0.0
    %130 = vmatprep.mubr.f32.mxu0 0.0
    %131 = vmatmul.mubr.f32.gmra.mrb[0].mxu0 %v64
    %v132 = vpop.f32.mrb[0].mxu0
    %v133 = vadd.f32 %v61, %v132
    %v134 = vpop.f32.mrb[0].mxu0
    %135 = vdwg.mxu0
    %v136 = vmul.f32 %v133, 0.01
    %v137 = vmax.f32 %v133, %v136
    %v138 = vrot.slane %v137, 4
    %v139 = vadd.f32 %v137, %v138
    %v140 = vrot.slane %v139, 2
    %v141 = vadd.f32 %v139, %v140
    %v142 = vrot.slane %v141, 1
    %v143 = vadd.f32 %v141, %v142
    %v144 = vmul.f32 %v143, 0.125
    %v145 = vsub.f32 %v137, %v144
    %v146 = vmul.f32 %v145, %v145
    %v147 = vrot.slane %v146, 4
    %v148 = vadd.f32 %v146, %v147
    %v149 = vrot.slane %v148, 2
    %v150 = vadd.f32 %v148, %v149
    %v151 = vrot.slane %v150, 1
    %v152 = vadd.f32 %v150, %v151
    %v153 = vmul.f32 %v152, 0.125
    %v154 = vadd.f32 %v153, 1e-05
    %v155 = vrsqrt.pop %v154
    %v156 = vmul.f32 %v57, %v155
    %v157 = vlaneseq
    %v158 = vshrl.u32 %v157, 7
    %v159 = vsub.s32 1, %v158
    %v160 = vrot.slane %v156, %v159
    %v161 = vmul.f32 %v145, %v160
    %v162 = vlaneseq
    %v163 = vshrl.u32 %v162, 7
    %v164 = vsub.s32 2, %v163
    %v165 = vrot.slane %v57, %v164
    %v166 = vadd.f32 %v161, %v165
    %167 = vst [vmem:[#allocation8] sm:$0xff] %v166
    // Predicated region
    $region26: #{tpu_custom_call.1} parent=1 // pred_check
      _
    $region27: #{tpu_custom_call.1} parent=1 // pred_check_branch
      %169 = sbr.rel (0) target = $region29
    $region28: #{tpu_custom_call.1} parent=1 // pred_region
      %s171 = ssub.s32 128, 128
      %172 = vsyncadd [#allocation4], %s171
      %s174 = sshll.u32 [#allocation8], 4
      %s175 = int_to_ptr.vmem [resolvable:$true] %s174
      %177 = dma.vmem_to_hbm [thread:$0]  %s175, 128, %s3, [#allocation4]
    $region29: #{tpu_custom_call.1} parent=1 // pred_fallthru
      _
    // Predicated region
    $region30: #{tpu_custom_call.1} parent=1 // pred_check
      _
    $region31: #{tpu_custom_call.1} parent=1 // pred_check_branch
      %179 = sbr.rel (0) target = $region33
    $region32: #{tpu_custom_call.1} parent=1 // pred_region
      %180 = dma.done [#allocation4], 128
    $region33: #{tpu_custom_call.1} parent=1 // pred_fallthru
      _
    %181 = vsyncpa [#allocation3], 1
    %182 = vsyncpa [#allocation6], 1
    %183 = vsyncpa [#allocation4], 1

</llo_original>
